<compile_context>
chip_gen: v7x
topology: tpu7x:2x2x1
jax: 0.10.0
libtpu: 0.0.40
codegen_flags: <defaults>
</compile_context>

<pallas_src>
import math

import jax
import jax.numpy as jnp
from jax.experimental import pallas as pl
from jax.experimental.pallas import tpu as pltpu


def _layer_scale_kernel(x_ref, gamma_ref, o_ref):
    # x_ref: (TILE_R, dim_eff) tile in the input dtype.
    # gamma_ref: (1, dim_eff) tile in the output/compute dtype.
    # Broadcast over rows (sublanes); upcast x only in-register (no-op when
    # dtypes already match).
    o_ref[...] = x_ref[...].astype(o_ref.dtype) * gamma_ref[...]


def _sublane_granule(dtype) -> int:
    # Sub-32-bit dtypes pack 2/4 rows per sublane; round row tiles so block
    # boundaries land on fully-packed sublanes.
    itemsize = jnp.dtype(dtype).itemsize
    return {4: 8, 2: 16, 1: 32}.get(itemsize, 8)


def _default_tile_pair_bytes() -> int:
    # Target bytes for one (x tile + out tile) pair. Double-buffered by the
    # BlockSpec pipeline this costs ~2x this figure of VMEM:
    #   * 4 MiB -> ~8 MiB total: safe under v5e's 16 MiB scoped default
    #     (128 MiB physical) and v6e's 32 MiB default.
    #   * 8 MiB -> ~16 MiB total: only used when the chip reports v7x-sized
    #     VMEM (64 MiB physical / 32 MiB scoped default), where 3.2 TB/s HBM
    #     makes the ~0.35us per-grid-step overhead a larger fraction of a step.
    try:
        info = pltpu.get_tpu_info()
        vmem = getattr(info, "vmem_capacity_bytes", None)
        if vmem is not None and vmem <= 64 * 1024 * 1024:
            return 8 * 1024 * 1024
    except Exception:
        pass
    return 4 * 1024 * 1024


def layer_scale(
    x: jax.Array,
    gamma: jax.Array,
    *,
    tile_r: int | None = None,
    donate_x: bool = False,
    min_pallas_elems: int = 1 << 14,
) -> jax.Array:
    """Apply LayerScale: x * gamma, where gamma has shape (x.shape[-1],)."""
    orig_shape = x.shape
    dim = orig_shape[-1]
    assert gamma.shape == (dim,), f"gamma shape {gamma.shape} != ({dim},)"

    # PyTorch semantics: x * gamma promotes (bf16 x with f32 gamma -> f32 out).
    out_dtype = jnp.promote_types(x.dtype, gamma.dtype)

    # Tiny inputs: pallas_call launch + DMA setup overhead dominates; let XLA
    # fuse the broadcast multiply into surrounding ops instead.
    # TODO(synk): at real call-sites prefer fusing x*gamma into the producing /
    # consuming op entirely — a standalone elementwise kernel is hard-capped at
    # the full HBM round trip and can only match, never beat, a fused epilogue.
    if x.size < min_pallas_elems:
        return x.astype(out_dtype) * gamma.astype(out_dtype)

    # Flatten leading dims -> 2-D (rows, dim) slab.
    rows = 1
    for s in orig_shape[:-1]:
        rows *= s
    x2d = x.reshape(rows, dim)
    gamma2d = gamma.astype(out_dtype).reshape(1, dim)

    # Lane-densify: fold k consecutive rows into the lane dimension so the
    # effective last dim is a multiple of 128 and stores lower to full
    # unmasked vst. Generalized to k = 128 // gcd(dim, 128).
    dim_eff, rows_eff = dim, rows
    if dim % 128 != 0:
        k = 128 // math.gcd(dim, 128)
        if k > 1 and rows % k == 0:
            rows_eff = rows // k
            dim_eff = dim * k
            x2d = x2d.reshape(rows_eff, dim_eff)
            gamma2d = jnp.tile(gamma2d, (1, k))
        # else: fall back to masked partial stores; padding rows would add a
        # full extra copy of a memory-bound operand.

    x_bytes = jnp.dtype(x.dtype).itemsize
    o_bytes = jnp.dtype(out_dtype).itemsize
    granule = _sublane_granule(x.dtype)

    if tile_r is None:
        pair_bytes_per_row = dim_eff * (x_bytes + o_bytes)
        tile_r = max(granule, _default_tile_pair_bytes() // max(1, pair_bytes_per_row))
        # Keep >= ~8 grid steps when rows permit, so the HBM<->VMEM pipeline
        # overlaps fetch/compute/writeback and v7x's 2 TCs each get tiles.
        min_steps = 8
        if rows_eff >= min_steps * granule:
            tile_r = min(tile_r, rows_eff // min_steps)

    tile_r = min(tile_r, rows_eff)
    if tile_r < rows_eff:
        # Non-full blocks: round to the packed-sublane granule for this dtype
        # (full-extent blocks are always layout-legal, so no rounding needed).
        tile_r = max(granule, (tile_r // granule) * granule)
        tile_r = min(tile_r, rows_eff)

    grid = (pl.cdiv(rows_eff, tile_r),)

    # Pure-bandwidth op: tell XLA's scheduler so it can overlap this call.
    cost = pl.CostEstimate(
        flops=rows * dim,
        transcendentals=0,
        bytes_accessed=rows * dim * (x_bytes + o_bytes) + dim * o_bytes,
    )

    kwargs = {}
    if donate_x and out_dtype == x.dtype:
        # Alias x2d (input 0) to the output: no second full-size HBM buffer.
        # (Only valid when the output dtype matches the input dtype.)
        kwargs["input_output_aliases"] = {0: 0}

    out = pl.pallas_call(
        _layer_scale_kernel,
        out_shape=jax.ShapeDtypeStruct((rows_eff, dim_eff), out_dtype),
        grid_spec=pltpu.PrefetchScalarGridSpec(
            num_scalar_prefetch=0,
            grid=grid,
            in_specs=[
                pl.BlockSpec((tile_r, dim_eff), lambda i: (i, 0)),
                pl.BlockSpec((1, dim_eff), lambda i: (0, 0)),
            ],
            out_specs=pl.BlockSpec((tile_r, dim_eff), lambda i: (i, 0)),
        ),
        compiler_params=pltpu.CompilerParams(
            # "parallel" lets v7x shard row tiles across its 2 TensorCores;
            # measured-neutral on single-TC v5e/v6e.
            # TODO(synk): if an xprof trace shows only one v7x TC active, add an
            # explicit leading size-2 grid axis marked pltpu.CORE_PARALLEL.
            dimension_semantics=("parallel",),
        ),
        cost_estimate=cost,
        **kwargs,
    )(x2d, gamma2d)

    return out.reshape(orig_shape)


if __name__ == "__main__":
    key = jax.random.PRNGKey(0)
    init_values = 0.1
    k0, k1, k2 = jax.random.split(key, 3)

    # Test 1: the module's natural small shape (dim=32 < 128 -> lane-densified
    # with k = 128 // gcd(32, 128) = 4).
    batch, seq, dim = 2, 8, 32
    x = jax.random.normal(k0, (batch, seq, dim), dtype=jnp.float32)
    gamma = init_values * jnp.ones((dim,), dtype=jnp.float32)  # nn.Parameter(init * ones(dim))
    y = layer_scale(x, gamma, min_pallas_elems=0)  # force the Pallas path
    jax.block_until_ready(y)
    assert jnp.allclose(y, x * gamma, atol=1e-6, rtol=1e-6), "mismatch vs reference (test 1)"

    # Test 2: lane-dense dim with a row count that does not divide the tile
    # (exercises the tiled/pipelined path with a partial boundary block).
    x2 = jax.random.normal(k1, (3, 100, 256), dtype=jnp.float32)
    gamma2 = init_values * jnp.ones((256,), dtype=jnp.float32)
    y2 = layer_scale(x2, gamma2, tile_r=128, min_pallas_elems=0)
    jax.block_until_ready(y2)
    assert jnp.allclose(y2, x2 * gamma2, atol=1e-6, rtol=1e-6), "mismatch vs reference (test 2)"

    # Test 3: generalized fold (dim=96, k=4) + PyTorch-style dtype promotion
    # (bf16 activations, f32 gamma parameter -> f32 output).
    x3 = jax.random.normal(k2, (4, 64, 96), dtype=jnp.bfloat16)
    gamma3 = init_values * jnp.ones((96,), dtype=jnp.float32)
    y3 = layer_scale(x3, gamma3, min_pallas_elems=0)
    jax.block_until_ready(y3)
    assert y3.dtype == jnp.float32, "output dtype should follow promotion (test 3)"
    ref3 = x3.astype(jnp.float32) * gamma3
    assert jnp.allclose(y3, ref3, atol=1e-6, rtol=1e-6), "mismatch vs reference (test 3)"

    print("KERNEL_OK")
</pallas_src>

<mosaic_0001>
module attributes {stable_mosaic.version = 11 : i64} {
  func.func @_layer_scale_kernel(%arg0: i32, %arg1: memref<4x128xf32, #tpu.memory_space<vmem>>, %arg2: memref<1x128xf32, #tpu.memory_space<vmem>>, %arg3: memref<4x128xf32, #tpu.memory_space<vmem>>) attributes {dimension_semantics = [#tpu.dimension_semantics<parallel>], iteration_bounds = array<i64: 1>, scalar_prefetch = 0 : i64, scratch_operands = 0 : i64, tpu.core_type = #tpu.core_type<tc>, window_params = [{transform_indices = @transform_0, window_bounds = array<i64: 4, 128>}, {pipeline_mode = #tpu.pipeline_mode<synchronous>, transform_indices = @transform_1, window_bounds = array<i64: 1, 128>}, {transform_indices = @transform_2, window_bounds = array<i64: 4, 128>}]} {
    %c0 = arith.constant 0 : index
    %c0_0 = arith.constant 0 : index
    %0 = vector.load %arg1[%c0, %c0_0] : memref<4x128xf32, #tpu.memory_space<vmem>>, vector<4x128xf32>
    %c0_1 = arith.constant 0 : index
    %c0_2 = arith.constant 0 : index
    %1 = vector.load %arg2[%c0_1, %c0_2] : memref<1x128xf32, #tpu.memory_space<vmem>>, vector<1x128xf32>
    %2 = vector.broadcast %1 : vector<1x128xf32> to vector<4x128xf32>
    %3 = arith.mulf %0, %2 : vector<4x128xf32>
    %c0_3 = arith.constant 0 : index
    %c0_4 = arith.constant 0 : index
    %4 = vector.load %arg3[%c0_3, %c0_4] : memref<4x128xf32, #tpu.memory_space<vmem>>, vector<4x128xf32>
    tpu.vector_store %arg3[%c0_3, %c0_4], %3 {strides = array<i32>} : memref<4x128xf32, #tpu.memory_space<vmem>>, vector<4x128xf32>,
    return
  }
  func.func @transform_0(%arg0: i32) -> (i32, i32) {
    %c0_i32 = arith.constant 0 : i32
    %c0_i32_0 = arith.constant 0 : i32
    return %arg0, %c0_i32 : i32, i32
  }
  func.func @transform_1(%arg0: i32) -> (i32, i32) {
    %c0_i32 = arith.constant 0 : i32
    %c0_i32_0 = arith.constant 0 : i32
    %c0_i32_1 = arith.constant 0 : i32
    return %c0_i32, %c0_i32_0 : i32, i32
  }
  func.func @transform_2(%arg0: i32) -> (i32, i32) {
    %c0_i32 = arith.constant 0 : i32
    %c0_i32_0 = arith.constant 0 : i32
    return %arg0, %c0_i32 : i32, i32
  }
}

</mosaic_0001>

<llo_original>
// kernel: tpu_custom_call.1
$region0: #{tpu_custom_call.1}
  #allocation0 [shape = 'u32[]', space=smem, size = 0x4, offset = 0x4, fixed_abs, tag = 'smem constant byte address 0x4 - core index']
  #allocation1 [shape = 'u32[144,128]{1,0:T(1,128)}', space=vmem, size = 0x12000, scoped, tag = 'internal scratch']
  %s0 = inlined_call_operand.hbm [shape: f32[4,128], index: 0, kind: input, shape index: {}]
  %s1 = inlined_call_operand.vmem [shape: f32[1,128], index: 1, kind: input, shape index: {}]
  %s2 = inlined_call_operand.hbm [shape: f32[4,128], index: 2, kind: output, shape index: {}]
  %s3 = sld [smem:[#allocation0]]
  $region22: #{tpu_custom_call.1} parent=0
    _
  %s5 = ssub.s32 1, %s3
  %s6 = scalar_select 0, %s5, %s3
  $region1: #{tpu_custom_call.1} parent=0
    #allocation2 [shape = 'u8[2048]{0}', space=vmem, size = 0x800, scoped, tag = 'input window, operand 0, single buffered']
    #allocation3 [shape = 's32[1]{0}', space=sflag, size = 0x4, scoped, tag = 'scoped memory for tpu_custom_call.1']
    #allocation4 [shape = 's32[1]{0}', space=sflag, size = 0x4, scoped, tag = 'scoped memory for tpu_custom_call.1']
    #allocation5 [shape = 'u8[2048]{0}', space=vmem, size = 0x800, scoped, tag = 'output window, operand 0, single buffered']
    %7 = vsyncpa [#allocation3], 0
    %8 = vsyncpa [#allocation4], 0
    // Predicated region
    $region2: #{tpu_custom_call.1} parent=1 // pred_check
      _
    $region3: #{tpu_custom_call.1} parent=1 // pred_check_branch
      %10 = sbr.rel (0) target = $region5
    $region4: #{tpu_custom_call.1} parent=1 // pred_region
      %s12 = ssub.s32 64, 64
      %13 = vsyncadd [#allocation3], %s12
      %s15 = sshll.u32 [#allocation2], 4
      %s16 = int_to_ptr.vmem [resolvable:$true] %s15
      %18 = dma.hbm_to_vmem [thread:$0]  %s0, 64, %s16, [#allocation3]
    $region5: #{tpu_custom_call.1} parent=1 // pred_fallthru
      _
    // Predicated region
    $region6: #{tpu_custom_call.1} parent=1 // pred_check
      _
    $region7: #{tpu_custom_call.1} parent=1 // pred_check_branch
      %20 = sbr.rel (0) target = $region9
    $region8: #{tpu_custom_call.1} parent=1 // pred_region
      _
    $region9: #{tpu_custom_call.1} parent=1 // pred_fallthru
      _
    // Predicated region
    $region10: #{tpu_custom_call.1} parent=1 // pred_check
      _
    $region11: #{tpu_custom_call.1} parent=1 // pred_check_branch
      %22 = sbr.rel (0) target = $region13
    $region12: #{tpu_custom_call.1} parent=1 // pred_region
      %23 = dma.done [#allocation3], 64
    $region13: #{tpu_custom_call.1} parent=1 // pred_fallthru
      _
    %v24 = vld [vmem:[#allocation2] sm:$0xf]
    %v25 = vld [vmem:[%s1] sm:$0x1]
    %v27 = vlaneseq
    %v28 = vshrl.u32 %v27, 7
    %v29 = vsub.s32 0, %v28
    %v30 = vrot.slane %v25, %v29
    %v32 = vmul.f32 %v24, %v30
    %33 = vst [vmem:[#allocation5] sm:$0xf] %v32
    // Predicated region
    $region14: #{tpu_custom_call.1} parent=1 // pred_check
      _
    $region15: #{tpu_custom_call.1} parent=1 // pred_check_branch
      %35 = sbr.rel (0) target = $region17
    $region16: #{tpu_custom_call.1} parent=1 // pred_region
      %s37 = ssub.s32 64, 64
      %38 = vsyncadd [#allocation4], %s37
      %s40 = sshll.u32 [#allocation5], 4
      %s41 = int_to_ptr.vmem [resolvable:$true] %s40
      %43 = dma.vmem_to_hbm [thread:$0]  %s41, 64, %s2, [#allocation4]
    $region17: #{tpu_custom_call.1} parent=1 // pred_fallthru
      _
    // Predicated region
    $region18: #{tpu_custom_call.1} parent=1 // pred_check
      _
    $region19: #{tpu_custom_call.1} parent=1 // pred_check_branch
      %45 = sbr.rel (0) target = $region21
    $region20: #{tpu_custom_call.1} parent=1 // pred_region
      %46 = dma.done [#allocation4], 64
    $region21: #{tpu_custom_call.1} parent=1 // pred_fallthru
      _
    %47 = vsyncpa [#allocation3], 1
    %48 = vsyncpa [#allocation4], 1

</llo_original>
